<compile_context>
chip_gen: v5e
topology: v5e:2x2
jax: 0.10.0
libtpu: 0.0.40
codegen_flags: <defaults>
</compile_context>

<pallas_src>
import functools

import jax
import jax.numpy as jnp
from jax import lax
from jax.experimental import pallas as pl
from jax.experimental.pallas import tpu as pltpu

LANES = 128
SUBLANES = 8
MIN_TILE = SUBLANES * LANES       # 1024 elements = one (8,128) f32 tile
MAX_BLOCK_ROWS = 4096             # 4096x128 f32 block = 2 MiB per input


def _acb_stats_kernel(rows, need_row_mask, recon_ref, target_ref, out_ref,
                      acc_sq, acc_sqz, acc_cz):
    """Accumulates (sum_sq_total, sum_sq_zero, cnt_zero) over the grid."""
    i = pl.program_id(0)
    nblk = pl.num_programs(0)
    block_rows = recon_ref.shape[0]

    @pl.when(i == 0)
    def _():
        acc_sq[...] = jnp.zeros_like(acc_sq)
        acc_sqz[...] = jnp.zeros_like(acc_sqz)
        acc_cz[...] = jnp.zeros_like(acc_cz)

    r = recon_ref[...].astype(jnp.float32)
    t = target_ref[...].astype(jnp.float32)

    if need_row_mask:
        # Only the final (partial) block can read rows past the array extent;
        # neutralize those rows: r == t (contributes 0 to both squared sums)
        # and t != 0 (not counted as a zero pixel). Emitted at trace time only
        # when rows is not a multiple of block_rows.
        rem_rows = rows - i * block_rows
        row_ids = lax.broadcasted_iota(jnp.int32, (block_rows, LANES), 0)
        row_valid = row_ids < rem_rows
        r = jnp.where(row_valid, r, 1.0)
        t = jnp.where(row_valid, t, 1.0)

    diff = r - t
    sq = diff * diff                                  # squared error
    zsel = jnp.where(t == 0.0, 1.0, 0.0)              # 1.0 where target == 0
    sqz = sq * zsel                                   # zero-class squared err

    # (block_rows, 128) -> (block_rows//8, 8, 128); summing over axis 0 is a
    # pure vreg-wise VPU add chain (no cross-lane/sublane movement).
    acc_sq[...] += jnp.sum(sq.reshape(-1, SUBLANES, LANES), axis=0)
    acc_sqz[...] += jnp.sum(sqz.reshape(-1, SUBLANES, LANES), axis=0)
    acc_cz[...] += jnp.sum(zsel.reshape(-1, SUBLANES, LANES), axis=0)

    # Full cross-lane reduction + SMEM store only once, at the end.
    @pl.when(i == nblk - 1)
    def _():
        out_ref[0] = jnp.sum(acc_sq[...])
        out_ref[1] = jnp.sum(acc_sqz[...])
        out_ref[2] = jnp.sum(acc_cz[...])


def acb_loss(reconstructed_image, target_image,
             zero_weighting=1.0, nonzero_weighting=1.0,
             max_block_rows=MAX_BLOCK_ROWS):
    """JAX/Pallas equivalent of ACBLoss(reduction='mean').forward()."""
    assert reconstructed_image.shape == target_image.shape
    assert max_block_rows % SUBLANES == 0
    total = int(reconstructed_image.size)

    r = reconstructed_image.reshape(-1)
    t = target_image.reshape(-1)

    # Pad (only if needed) to a multiple of one (8,128) tile so the lane-dense
    # reshape and the in-kernel (-1, 8, 128) view are valid. Padding uses the
    # neutral sentinel r == t == 1 so no per-element masking is needed.
    pad = (-total) % MIN_TILE
    if pad:
        r = jnp.pad(r, (0, pad), constant_values=1.0)
        t = jnp.pad(t, (0, pad), constant_values=1.0)
    rows = (total + pad) // LANES            # multiple of 8

    block_rows = min(max_block_rows, rows)   # multiple of 8
    grid = pl.cdiv(rows, block_rows)
    need_row_mask = (rows % block_rows) != 0

    r = r.reshape(rows, LANES)
    t = t.reshape(rows, LANES)

    tile_spec = pl.BlockSpec((block_rows, LANES), lambda i: (i, 0))

    stats = pl.pallas_call(
        functools.partial(_acb_stats_kernel, rows, need_row_mask),
        out_shape=jax.ShapeDtypeStruct((3,), jnp.float32),
        grid=(grid,),
        in_specs=[tile_spec, tile_spec],
        out_specs=pl.BlockSpec(memory_space=pltpu.MemorySpace.SMEM),
        scratch_shapes=[pltpu.VMEM((SUBLANES, LANES), jnp.float32)] * 3,
        compiler_params=pltpu.CompilerParams(
            dimension_semantics=("arbitrary",),
            vmem_limit_bytes=48 * 1024 * 1024),
    )(r, t)

    sum_sq_total = stats[0]
    sum_sq_zero = stats[1]
    cnt_zero = stats[2]
    sum_sq_nonzero = sum_sq_total - sum_sq_zero
    cnt_nonzero = jnp.float32(total) - cnt_zero

    # MSELoss over an empty selection yields NaN in torch; the module replaces
    # it with 0 — equivalent to the jnp.where below.
    zero_loss = jnp.where(cnt_zero > 0,
                          sum_sq_zero / jnp.maximum(cnt_zero, 1.0), 0.0)
    nonzero_loss = jnp.where(cnt_nonzero > 0,
                             sum_sq_nonzero / jnp.maximum(cnt_nonzero, 1.0),
                             0.0)

    return zero_weighting * zero_loss + nonzero_weighting * nonzero_loss


def _acb_loss_ref(recon, target, zw=1.0, nzw=1.0):
    """Pure-JAX reference for verification."""
    r = recon.astype(jnp.float32).reshape(-1)
    t = target.astype(jnp.float32).reshape(-1)
    sq = (r - t) ** 2
    zm = (t == 0).astype(jnp.float32)
    nm = 1.0 - zm
    cz, cnz = jnp.sum(zm), jnp.sum(nm)
    zl = jnp.where(cz > 0, jnp.sum(sq * zm) / jnp.maximum(cz, 1.0), 0.0)
    nzl = jnp.where(cnz > 0, jnp.sum(sq * nm) / jnp.maximum(cnz, 1.0), 0.0)
    return zw * zl + nzw * nzl


if __name__ == "__main__":
    key = jax.random.PRNGKey(0)
    keys = jax.random.split(key, 9)

    # Case 1: NCHW image pair, exact multiple of the (8,128) tile.
    B, C, H, W = 2, 4, 16, 16
    reconstructed = jax.random.normal(keys[0], (B, C, H, W), dtype=jnp.float32)
    target_vals = jax.random.normal(keys[1], (B, C, H, W), dtype=jnp.float32)
    sparsity_mask = jax.random.bernoulli(keys[2], p=0.5, shape=(B, C, H, W))
    target = jnp.where(sparsity_mask, target_vals, 0.0)

    loss = acb_loss(reconstructed, target, 1.0, 1.0)
    loss = jax.block_until_ready(loss)
    ref = _acb_loss_ref(reconstructed, target, 1.0, 1.0)
    assert jnp.allclose(loss, ref, rtol=1e-5, atol=1e-5), (loss, ref)

    # Case 2: ragged element count — exercises the sentinel tail padding.
    shape2 = (3, 5, 7, 11)  # 1155 elements, not a multiple of 1024
    rec2 = jax.random.normal(keys[3], shape2, dtype=jnp.float32)
    tgt2 = jnp.where(jax.random.bernoulli(keys[4], p=0.4, shape=shape2),
                     jax.random.normal(keys[5], shape2, dtype=jnp.float32), 0.0)
    loss2 = jax.block_until_ready(acb_loss(rec2, tgt2, 0.7, 1.3))
    ref2 = _acb_loss_ref(rec2, tgt2, 0.7, 1.3)
    assert jnp.allclose(loss2, ref2, rtol=1e-5, atol=1e-5), (loss2, ref2)

    # Case 3: multi-block grid with a partial final block (small max_block_rows
    # to exercise the row-mask path at small shapes) + sentinel padding.
    shape3 = (2, 5, 10, 25)  # 2500 elements -> padded to 3072, 24 rows
    rec3 = jax.random.normal(keys[6], shape3, dtype=jnp.float32)
    tgt3 = jnp.where(jax.random.bernoulli(keys[7], p=0.3, shape=shape3),
                     jax.random.normal(keys[8], shape3, dtype=jnp.float32), 0.0)
    loss3 = jax.block_until_ready(acb_loss(rec3, tgt3, 0.5, 2.0,
                                           max_block_rows=16))
    ref3 = _acb_loss_ref(rec3, tgt3, 0.5, 2.0)
    assert jnp.allclose(loss3, ref3, rtol=1e-5, atol=1e-5), (loss3, ref3)

    print("KERNEL_OK")
</pallas_src>

<mosaic_0001>
module attributes {stable_mosaic.version = 11 : i64} {
  func.func @_acb_stats_kernel(%arg0: i32, %arg1: memref<16x128xf32, #tpu.memory_space<vmem>>, %arg2: memref<16x128xf32, #tpu.memory_space<vmem>>, %arg3: memref<3xf32, #tpu.memory_space<smem>>, %arg4: memref<8x128xf32, #tpu.memory_space<vmem>>, %arg5: memref<8x128xf32, #tpu.memory_space<vmem>>, %arg6: memref<8x128xf32, #tpu.memory_space<vmem>>) attributes {dimension_semantics = [#tpu.dimension_semantics<arbitrary>], iteration_bounds = array<i64: 1>, scalar_prefetch = 0 : i64, scratch_operands = 3 : i64, tpu.core_type = #tpu.core_type<tc>, window_params = [{transform_indices = @transform_0, window_bounds = array<i64: 16, 128>}, {transform_indices = @transform_1, window_bounds = array<i64: 16, 128>}, {transform_indices = @transform_2, window_bounds = array<i64: 3>}]} {
    %c0_i32 = arith.constant 0 : i32
    %0 = arith.cmpi eq, %arg0, %c0_i32 : i32
    %1 = arith.extui %0 : i1 to i32
    %c0_i32_0 = arith.constant 0 : i32
    %2 = arith.cmpi ne, %1, %c0_i32_0 : i32
    scf.if %2 {
      %cst_23 = arith.constant 0.000000e+00 : f32
      %31 = vector.broadcast %cst_23 : f32 to vector<8x128xf32>
      %c0_24 = arith.constant 0 : index
      %c0_25 = arith.constant 0 : index
      %32 = vector.load %arg4[%c0_24, %c0_25] : memref<8x128xf32, #tpu.memory_space<vmem>>, vector<8x128xf32>
      tpu.vector_store %arg4[%c0_24, %c0_25], %31 {strides = array<i32>} : memref<8x128xf32, #tpu.memory_space<vmem>>, vector<8x128xf32>,
      %cst_26 = arith.constant 0.000000e+00 : f32
      %33 = vector.broadcast %cst_26 : f32 to vector<8x128xf32>
      %c0_27 = arith.constant 0 : index
      %c0_28 = arith.constant 0 : index
      %34 = vector.load %arg5[%c0_27, %c0_28] : memref<8x128xf32, #tpu.memory_space<vmem>>, vector<8x128xf32>
      tpu.vector_store %arg5[%c0_27, %c0_28], %33 {strides = array<i32>} : memref<8x128xf32, #tpu.memory_space<vmem>>, vector<8x128xf32>,
      %cst_29 = arith.constant 0.000000e+00 : f32
      %35 = vector.broadcast %cst_29 : f32 to vector<8x128xf32>
      %c0_30 = arith.constant 0 : index
      %c0_31 = arith.constant 0 : index
      %36 = vector.load %arg6[%c0_30, %c0_31] : memref<8x128xf32, #tpu.memory_space<vmem>>, vector<8x128xf32>
      tpu.vector_store %arg6[%c0_30, %c0_31], %35 {strides = array<i32>} : memref<8x128xf32, #tpu.memory_space<vmem>>, vector<8x128xf32>,
    } else {
    }
    %c0 = arith.constant 0 : index
    %c0_1 = arith.constant 0 : index
    %3 = vector.load %arg1[%c0, %c0_1] : memref<16x128xf32, #tpu.memory_space<vmem>>, vector<16x128xf32>
    %c0_2 = arith.constant 0 : index
    %c0_3 = arith.constant 0 : index
    %4 = vector.load %arg2[%c0_2, %c0_3] : memref<16x128xf32, #tpu.memory_space<vmem>>, vector<16x128xf32>
    %5 = arith.subf %3, %4 : vector<16x128xf32>
    %6 = arith.mulf %5, %5 : vector<16x128xf32>
    %cst = arith.constant 0.000000e+00 : f32
    %7 = vector.broadcast %cst : f32 to vector<16x128xf32>
    %8 = arith.cmpf oeq, %4, %7 : vector<16x128xf32>
    %cst_4 = arith.constant 1.000000e+00 : f32
    %cst_5 = arith.constant 0.000000e+00 : f32
    %9 = vector.broadcast %cst_4 : f32 to vector<16x128xf32>
    %10 = vector.broadcast %cst_5 : f32 to vector<16x128xf32>
    %11 = arith.select %8, %9, %10 : vector<16x128xi1>, vector<16x128xf32>
    %12 = arith.mulf %6, %11 : vector<16x128xf32>
    %c0_6 = arith.constant 0 : index
    %c0_7 = arith.constant 0 : index
    %13 = vector.load %arg4[%c0_6, %c0_7] : memref<8x128xf32, #tpu.memory_space<vmem>>, vector<8x128xf32>
    %14 = vector.shape_cast %6 : vector<16x128xf32> to vector<2x8x128xf32>
    %cst_8 = arith.constant dense<0.000000e+00> : vector<8x128xf32>
    %15 = vector.multi_reduction <add>, %14, %cst_8 [0] : vector<2x8x128xf32> to vector<8x128xf32>
    %16 = arith.addf %13, %15 : vector<8x128xf32>
    %c0_9 = arith.constant 0 : index
    %c0_10 = arith.constant 0 : index
    %17 = vector.load %arg4[%c0_9, %c0_10] : memref<8x128xf32, #tpu.memory_space<vmem>>, vector<8x128xf32>
    tpu.vector_store %arg4[%c0_9, %c0_10], %16 {strides = array<i32>} : memref<8x128xf32, #tpu.memory_space<vmem>>, vector<8x128xf32>,
    %c0_11 = arith.constant 0 : index
    %c0_12 = arith.constant 0 : index
    %18 = vector.load %arg5[%c0_11, %c0_12] : memref<8x128xf32, #tpu.memory_space<vmem>>, vector<8x128xf32>
    %19 = vector.shape_cast %12 : vector<16x128xf32> to vector<2x8x128xf32>
    %cst_13 = arith.constant dense<0.000000e+00> : vector<8x128xf32>
    %20 = vector.multi_reduction <add>, %19, %cst_13 [0] : vector<2x8x128xf32> to vector<8x128xf32>
    %21 = arith.addf %18, %20 : vector<8x128xf32>
    %c0_14 = arith.constant 0 : index
    %c0_15 = arith.constant 0 : index
    %22 = vector.load %arg5[%c0_14, %c0_15] : memref<8x128xf32, #tpu.memory_space<vmem>>, vector<8x128xf32>
    tpu.vector_store %arg5[%c0_14, %c0_15], %21 {strides = array<i32>} : memref<8x128xf32, #tpu.memory_space<vmem>>, vector<8x128xf32>,
    %c0_16 = arith.constant 0 : index
    %c0_17 = arith.constant 0 : index
    %23 = vector.load %arg6[%c0_16, %c0_17] : memref<8x128xf32, #tpu.memory_space<vmem>>, vector<8x128xf32>
    %24 = vector.shape_cast %11 : vector<16x128xf32> to vector<2x8x128xf32>
    %cst_18 = arith.constant dense<0.000000e+00> : vector<8x128xf32>
    %25 = vector.multi_reduction <add>, %24, %cst_18 [0] : vector<2x8x128xf32> to vector<8x128xf32>
    %26 = arith.addf %23, %25 : vector<8x128xf32>
    %c0_19 = arith.constant 0 : index
    %c0_20 = arith.constant 0 : index
    %27 = vector.load %arg6[%c0_19, %c0_20] : memref<8x128xf32, #tpu.memory_space<vmem>>, vector<8x128xf32>
    tpu.vector_store %arg6[%c0_19, %c0_20], %26 {strides = array<i32>} : memref<8x128xf32, #tpu.memory_space<vmem>>, vector<8x128xf32>,
    %c0_i32_21 = arith.constant 0 : i32
    %28 = arith.cmpi eq, %arg0, %c0_i32_21 : i32
    %29 = arith.extui %28 : i1 to i32
    %c0_i32_22 = arith.constant 0 : i32
    %30 = arith.cmpi ne, %29, %c0_i32_22 : i32
    scf.if %30 {
      %c0_23 = arith.constant 0 : index
      %c0_24 = arith.constant 0 : index
      %31 = vector.load %arg4[%c0_23, %c0_24] : memref<8x128xf32, #tpu.memory_space<vmem>>, vector<8x128xf32>
      %32 = vector.shape_cast %31 : vector<8x128xf32> to vector<1x8x128xf32>
      %cst_25 = arith.constant dense<0.000000e+00> : vector<1xf32>
      %33 = vector.multi_reduction <add>, %32, %cst_25 [1, 2] : vector<1x8x128xf32> to vector<1xf32>
      %34 = vector.shape_cast %33 : vector<1xf32> to vector<1x1x1xf32>
      %35 = vector.extract %34[0, 0, 0] : f32 from vector<1x1x1xf32>
      %c0_26 = arith.constant 0 : index
      %36 = memref.load %arg3[%c0_26] : memref<3xf32, #tpu.memory_space<smem>>
      memref.store %35, %arg3[%c0_26] : memref<3xf32, #tpu.memory_space<smem>>
      %c0_27 = arith.constant 0 : index
      %c0_28 = arith.constant 0 : index
      %37 = vector.load %arg5[%c0_27, %c0_28] : memref<8x128xf32, #tpu.memory_space<vmem>>, vector<8x128xf32>
      %38 = vector.shape_cast %37 : vector<8x128xf32> to vector<1x8x128xf32>
      %cst_29 = arith.constant dense<0.000000e+00> : vector<1xf32>
      %39 = vector.multi_reduction <add>, %38, %cst_29 [1, 2] : vector<1x8x128xf32> to vector<1xf32>
      %40 = vector.shape_cast %39 : vector<1xf32> to vector<1x1x1xf32>
      %41 = vector.extract %40[0, 0, 0] : f32 from vector<1x1x1xf32>
      %c1 = arith.constant 1 : index
      %42 = memref.load %arg3[%c1] : memref<3xf32, #tpu.memory_space<smem>>
      memref.store %41, %arg3[%c1] : memref<3xf32, #tpu.memory_space<smem>>
      %c0_30 = arith.constant 0 : index
      %c0_31 = arith.constant 0 : index
      %43 = vector.load %arg6[%c0_30, %c0_31] : memref<8x128xf32, #tpu.memory_space<vmem>>, vector<8x128xf32>
      %44 = vector.shape_cast %43 : vector<8x128xf32> to vector<1x8x128xf32>
      %cst_32 = arith.constant dense<0.000000e+00> : vector<1xf32>
      %45 = vector.multi_reduction <add>, %44, %cst_32 [1, 2] : vector<1x8x128xf32> to vector<1xf32>
      %46 = vector.shape_cast %45 : vector<1xf32> to vector<1x1x1xf32>
      %47 = vector.extract %46[0, 0, 0] : f32 from vector<1x1x1xf32>
      %c2 = arith.constant 2 : index
      %48 = memref.load %arg3[%c2] : memref<3xf32, #tpu.memory_space<smem>>
      memref.store %47, %arg3[%c2] : memref<3xf32, #tpu.memory_space<smem>>
    } else {
    }
    return
  }
  func.func @transform_0(%arg0: i32) -> (i32, i32) {
    %c0_i32 = arith.constant 0 : i32
    %c0_i32_0 = arith.constant 0 : i32
    return %arg0, %c0_i32 : i32, i32
  }
  func.func @transform_1(%arg0: i32) -> (i32, i32) {
    %c0_i32 = arith.constant 0 : i32
    %c0_i32_0 = arith.constant 0 : i32
    return %arg0, %c0_i32 : i32, i32
  }
  func.func @transform_2(%arg0: i32) -> i32 {
    %c0_i32 = arith.constant 0 : i32
    %c0_i32_0 = arith.constant 0 : i32
    return %c0_i32 : i32
  }
}

</mosaic_0001>

<llo_original>
// kernel: tpu_custom_call.1
$region0: #{tpu_custom_call.1}
  #allocation0 [shape = 'u32[]', space=smem, size = 0x4, offset = 0x4, fixed_abs, tag = 'smem constant byte address 0x4 - core index']
  #allocation1 [shape = 'u32[72,128]{1,0:T(1,128)}', space=vmem, size = 0x9000, scoped, tag = 'internal scratch']
  #allocation2 [shape = 'f32[8,128]{1,0:T(8,128)}', space=vmem, size = 0x1000, scoped, tag = 'scratch operand']
  #allocation3 [shape = 'f32[8,128]{1,0:T(8,128)}', space=vmem, size = 0x1000, scoped, tag = 'scratch operand']
  #allocation4 [shape = 'f32[8,128]{1,0:T(8,128)}', space=vmem, size = 0x1000, scoped, tag = 'scratch operand']
  %s0 = inlined_call_operand.hbm [shape: f32[16,128], index: 0, kind: input, shape index: {}]
  %s1 = inlined_call_operand.hbm [shape: f32[16,128], index: 1, kind: input, shape index: {}]
  %s2 = inlined_call_operand.hbm [shape: f32[3], index: 2, kind: output, shape index: {}]
  %s3 = sld [smem:[#allocation0]]
  $region34: #{tpu_custom_call.1} parent=0
    _
  %s5 = ssub.s32 1, %s3
  %s6 = scalar_select 0, %s5, %s3
  $region1: #{tpu_custom_call.1} parent=0
    #allocation5 [shape = 'u8[8192]{0}', space=vmem, size = 0x2000, scoped, tag = 'input window, operand 0, single buffered']
    #allocation6 [shape = 's32[1]{0}', space=sflag, size = 0x4, scoped, tag = 'scoped memory for tpu_custom_call.1']
    #allocation7 [shape = 's32[1]{0}', space=sflag, size = 0x4, scoped, tag = 'scoped memory for tpu_custom_call.1']
    #allocation8 [shape = 'u8[8192]{0}', space=vmem, size = 0x2000, scoped, tag = 'input window, operand 1, single buffered']
    #allocation9 [shape = 's32[1]{0}', space=sflag, size = 0x4, scoped, tag = 'scoped memory for tpu_custom_call.1']
    #allocation10 [shape = 'u8[512]{0}', space=smem, size = 0x200, scoped, tag = 'output window, operand 0, single buffered']
    %7 = vsyncpa [#allocation6], 0
    %8 = vsyncpa [#allocation9], 0
    %9 = vsyncpa [#allocation7], 0
    // Predicated region
    $region2: #{tpu_custom_call.1} parent=1 // pred_check
      _
    $region3: #{tpu_custom_call.1} parent=1 // pred_check_branch
      %11 = sbr.rel (0) target = $region5
    $region4: #{tpu_custom_call.1} parent=1 // pred_region
      %13 = vsyncadd [#allocation6], 0
      %s14 = sshll.u32 %s0, 4
      %s15 = int_to_ptr.hbm [resolvable:$true] %s14
      %s16 = sshll.u32 [#allocation5], 4
      %s17 = int_to_ptr.vmem [resolvable:$true] %s16
      %22 = dma.hbm_to_vmem [thread:$0]  %s15, 256, %s17, [#allocation6], 128, 128, 8
    $region5: #{tpu_custom_call.1} parent=1 // pred_fallthru
      _
    // Predicated region
    $region6: #{tpu_custom_call.1} parent=1 // pred_check
      _
    $region7: #{tpu_custom_call.1} parent=1 // pred_check_branch
      %24 = sbr.rel (0) target = $region9
    $region8: #{tpu_custom_call.1} parent=1 // pred_region
      %26 = vsyncadd [#allocation9], 0
      %s27 = sshll.u32 %s1, 4
      %s28 = int_to_ptr.hbm [resolvable:$true] %s27
      %s29 = sshll.u32 [#allocation8], 4
      %s30 = int_to_ptr.vmem [resolvable:$true] %s29
      %35 = dma.hbm_to_vmem [thread:$0]  %s28, 256, %s30, [#allocation9], 128, 128, 8
    $region9: #{tpu_custom_call.1} parent=1 // pred_fallthru
      _
    // Predicated region
    $region10: #{tpu_custom_call.1} parent=1 // pred_check
      _
    $region11: #{tpu_custom_call.1} parent=1 // pred_check_branch
      %37 = sbr.rel (0) target = $region13
    $region12: #{tpu_custom_call.1} parent=1 // pred_region
      %39 = dma.done [#allocation6], 256
    $region13: #{tpu_custom_call.1} parent=1 // pred_fallthru
      _
    // Predicated region
    $region14: #{tpu_custom_call.1} parent=1 // pred_check
      _
    $region15: #{tpu_custom_call.1} parent=1 // pred_check_branch
      %41 = sbr.rel (0) target = $region17
    $region16: #{tpu_custom_call.1} parent=1 // pred_region
      %43 = dma.done [#allocation9], 256
    $region17: #{tpu_custom_call.1} parent=1 // pred_fallthru
      _
    %p44 = scmp.eq.s32.totalorder 0, 0
    // Predicated region
    $region18: #{tpu_custom_call.1} parent=1 // pred_check
      %p45 = pneg %p44
    $region19: #{tpu_custom_call.1} parent=1 // pred_check_branch
      %47 = sbr.rel (%p45) target = $region21
    $region20: #{tpu_custom_call.1} parent=1 // pred_region
      %48 = vst [vmem:[#allocation2] sm:$0xff] 0.0
      %49 = vst [vmem:[#allocation3] sm:$0xff] 0.0
      %50 = vst [vmem:[#allocation4] sm:$0xff] 0.0
    $region21: #{tpu_custom_call.1} parent=1 // pred_fallthru
      _
    %v51 = vld [vmem:[#allocation5] sm:$0xff]
    %v52 = vld [vmem:[#allocation5 + $0x8] sm:$0xff]
    %v53 = vld [vmem:[#allocation8] sm:$0xff]
    %v54 = vld [vmem:[#allocation8 + $0x8] sm:$0xff]
    %v55 = vsub.f32 %v51, %v53
    %v56 = vsub.f32 %v52, %v54
    %v57 = vmul.f32 %v55, %v55
    %v58 = vmul.f32 %v56, %v56
    %vm59 = vcmp.eq.f32.partialorder %v53, 0.0
    %vm60 = vcmp.eq.f32.partialorder %v54, 0.0
    %v61 = vsel %vm59, 1.0, 0.0
    %v62 = vsel %vm60, 1.0, 0.0
    %v63 = vmul.f32 %v57, %v61
    %v64 = vmul.f32 %v58, %v62
    %v65 = vld [vmem:[#allocation2] sm:$0xff]
    %v66 = vadd.f32 %v57, %v58
    %v67 = vadd.f32 %v65, %v66
    %68 = vst [vmem:[#allocation2] sm:$0xff] %v67
    %v69 = vld [vmem:[#allocation3] sm:$0xff]
    %v70 = vadd.f32 %v63, %v64
    %v71 = vadd.f32 %v69, %v70
    %72 = vst [vmem:[#allocation3] sm:$0xff] %v71
    %v73 = vld [vmem:[#allocation4] sm:$0xff]
    %v74 = vadd.f32 %v61, %v62
    %v75 = vadd.f32 %v73, %v74
    %76 = vst [vmem:[#allocation4] sm:$0xff] %v75
    // Predicated region
    $region22: #{tpu_custom_call.1} parent=1 // pred_check
      %p77 = pneg %p44
    $region23: #{tpu_custom_call.1} parent=1 // pred_check_branch
      %79 = sbr.rel (%p77) target = $region25
    $region24: #{tpu_custom_call.1} parent=1 // pred_region
      %v80 = vld [vmem:[#allocation2] sm:$0xff]
      %81 = vadd.xlane.f32.xlu0 %v80
      %v82 = vpop.xlane.xlu0 %81
      %v83 = vrot.slane %v82, 4
      %v84 = vadd.f32 %v82, %v83
      %v85 = vrot.slane %v84, 2
      %v86 = vadd.f32 %v84, %v85
      %v87 = vrot.slane %v86, 1
      %v88 = vadd.f32 %v86, %v87
      %s89 = vtos %v88
      %s90 = scalar_lea.smem [#allocation10], 0
      %91 = sst [smem:[%s90]] %s89
      %v92 = vld [vmem:[#allocation3] sm:$0xff]
      %93 = vadd.xlane.f32.xlu0 %v92
      %v94 = vpop.xlane.xlu0 %93
      %v95 = vrot.slane %v94, 4
      %v96 = vadd.f32 %v94, %v95
      %v97 = vrot.slane %v96, 2
      %v98 = vadd.f32 %v96, %v97
      %v99 = vrot.slane %v98, 1
      %v100 = vadd.f32 %v98, %v99
      %s101 = vtos %v100
      %s102 = scalar_lea.smem [#allocation10], 1
      %103 = sst [smem:[%s102]] %s101
      %v104 = vld [vmem:[#allocation4] sm:$0xff]
      %105 = vadd.xlane.f32.xlu0 %v104
      %v106 = vpop.xlane.xlu0 %105
      %v107 = vrot.slane %v106, 4
      %v108 = vadd.f32 %v106, %v107
      %v109 = vrot.slane %v108, 2
      %v110 = vadd.f32 %v108, %v109
      %v111 = vrot.slane %v110, 1
      %v112 = vadd.f32 %v110, %v111
      %s113 = vtos %v112
      %s114 = scalar_lea.smem [#allocation10], 2
      %115 = sst [smem:[%s114]] %s113
    $region25: #{tpu_custom_call.1} parent=1 // pred_fallthru
      _
    // Predicated region
    $region26: #{tpu_custom_call.1} parent=1 // pred_check
      _
    $region27: #{tpu_custom_call.1} parent=1 // pred_check_branch
      %117 = sbr.rel (0) target = $region29
    $region28: #{tpu_custom_call.1} parent=1 // pred_region
      %119 = vsyncadd [#allocation7], 0
      %s121 = sshll.u32 %s2, 4
      %s122 = int_to_ptr.hbm [resolvable:$true] %s121
      %124 = dma.smem_to_hbm [#allocation10], 16, %s122, [#allocation7]
    $region29: #{tpu_custom_call.1} parent=1 // pred_fallthru
      _
    // Predicated region
    $region30: #{tpu_custom_call.1} parent=1 // pred_check
      _
    $region31: #{tpu_custom_call.1} parent=1 // pred_check_branch
      %126 = sbr.rel (0) target = $region33
    $region32: #{tpu_custom_call.1} parent=1 // pred_region
      %128 = dma.done [#allocation7], 16
    $region33: #{tpu_custom_call.1} parent=1 // pred_fallthru
      _
    %129 = sfence
    %130 = vsyncpa [#allocation6], 1
    %131 = vsyncpa [#allocation9], 1
    %132 = vsyncpa [#allocation7], 1

</llo_original>
